<compile_context>
chip_gen: v5e
topology: v5e:2x2
jax: 0.10.0
libtpu: 0.0.40
codegen_flags: <defaults>
</compile_context>

<pallas_src>
import math

import jax
import jax.numpy as jnp
from jax.experimental import pallas as pl
from jax.experimental.pallas import tpu as pltpu


# ----------------------------------------------------------------------------
# Kernel body: a single broadcast add.  b_ref is either (1, lane_blk) (bias
# repeated along lanes) or (row_blk, 1) (per-row bias, broadcast across lanes).
# ----------------------------------------------------------------------------
def _bias_add_kernel(x_ref, b_ref, o_ref):
    o_ref[...] = x_ref[...] + b_ref[...]


def _per_block_byte_budget() -> int:
    """Bytes allowed for one x block (output block is the same size; both are
    double-buffered, so the resident working set is ~4x this)."""
    try:
        cap = int(pltpu.get_tpu_info().vmem_capacity_bytes)
        # cap//48 -> ~2.6 MiB on 128 MiB VMEM (v5e/v6e), ~1.3 MiB on 64 MiB (v7x);
        # working set stays comfortably under every generation's default scoped
        # VMEM limit (16/32/32 MiB) without needing vmem_limit_bytes.
        return min(4 * 1024 * 1024, max(1024 * 1024, cap // 48))
    except Exception:  # pragma: no cover - conservative fallback
        return 2 * 1024 * 1024


def _pick_blocks(rows: int, lanes: int, itemsize: int):
    """VMEM- and dtype-aware block selection (row block multiple of 8 or full
    extent; lane block multiple of 128 or full extent)."""
    budget = _per_block_byte_budget()
    # Lane (last-dim) block: full extent if that still allows >= 8 rows,
    # otherwise a 128-multiple chunk.
    if lanes * itemsize * 8 <= budget:
        lane_blk = lanes
    else:
        lane_blk = max(128, (budget // (8 * itemsize)) // 128 * 128)
        lane_blk = min(lane_blk, max(128, (lanes // 128) * 128))
    row_blk = min(rows, 1024, max(8, budget // (lane_blk * itemsize)))
    if row_blk < rows:
        row_blk = max(8, (row_blk // 8) * 8)  # sublane-aligned unless full extent
    return row_blk, lane_blk


def _bias_add_2d(x2, b2):
    """x2: (rows, lanes); b2: (1, lanes) or (rows, 1).  Returns x2 + b2."""
    rows, lanes = x2.shape
    itemsize = jnp.dtype(x2.dtype).itemsize
    row_blk, lane_blk = _pick_blocks(rows, lanes, itemsize)
    grid = (pl.cdiv(rows, row_blk), pl.cdiv(lanes, lane_blk))

    if b2.shape[0] == 1:
        b_spec = pl.BlockSpec((1, lane_blk), lambda i, j: (0, j))
    else:
        b_spec = pl.BlockSpec((row_blk, 1), lambda i, j: (i, 0))

    cost = pl.CostEstimate(
        flops=rows * lanes,
        transcendentals=0,
        bytes_accessed=2 * rows * lanes * itemsize + int(b2.size) * itemsize,
    )

    return pl.pallas_call(
        _bias_add_kernel,
        out_shape=jax.ShapeDtypeStruct((rows, lanes), x2.dtype),
        grid_spec=pltpu.PrefetchScalarGridSpec(
            num_scalar_prefetch=0,
            grid=grid,
            in_specs=[
                pl.BlockSpec((row_blk, lane_blk), lambda i, j: (i, j)),
                b_spec,
            ],
            out_specs=pl.BlockSpec((row_blk, lane_blk), lambda i, j: (i, j)),
        ),
        compiler_params=pltpu.CompilerParams(
            dimension_semantics=("parallel", "parallel")
        ),
        cost_estimate=cost,
    )(x2, b2)


def add_bias(x, bias_param):
    """Forward of AddBias.  bias_param has shape (C, 1), mirroring
    nn.Parameter(bias.unsqueeze(1))."""
    c = bias_param.shape[0]
    out_dtype = jnp.result_type(x.dtype, bias_param.dtype)  # PyTorch-style promotion
    x = x.astype(out_dtype)
    bias_1d = bias_param.reshape(c).astype(out_dtype)

    if x.ndim == 2:
        n, cc = x.shape
        assert cc == c
        if c % 128 == 0:
            # Already lane-dense.
            return _bias_add_2d(x, bias_1d.reshape(1, c))
        total = n * c
        lane_width = (c * 128) // math.gcd(c, 128)  # lcm(C, 128)
        if total % lane_width == 0:
            # Lane-dense repack: free reshape of the contiguous (N, C) buffer.
            reps = lane_width // c
            b_row = jnp.tile(bias_1d, reps).reshape(1, lane_width)
            out = _bias_add_2d(x.reshape(total // lane_width, lane_width), b_row)
            return out.reshape(n, c)
        # Fallback for awkward shapes: correct, lanes partially masked.
        return _bias_add_2d(x, bias_1d.reshape(1, c))

    elif x.ndim == 4:
        n, cc, h, w = x.shape
        assert cc == c
        hw = h * w
        # Free view of contiguous NCHW: row r = n*C + c  ->  bias[r % C].
        x2 = x.reshape(n * c, hw)
        b_col = jnp.tile(bias_1d, n).reshape(n * c, 1)  # tiny vs. x traffic
        out2 = _bias_add_2d(x2, b_col)
        return out2.reshape(n, c, h, w)

    else:
        raise ValueError("AddBias supports 2D (N, C) or 4D (N, C, H, W) inputs")


if __name__ == "__main__":
    key = jax.random.PRNGKey(0)
    k_bias, k_x2a, k_x2b, k_x4 = jax.random.split(key, 4)

    C = 4
    # Deterministic parameter, stored as (C, 1) like the PyTorch module.
    bias_param = jax.random.normal(k_bias, (C, 1), dtype=jnp.float32)

    fwd = jax.jit(add_bias)

    # 2D case, lane-dense repack path: (N, C) with N*C divisible by lcm(C,128).
    x2d = jax.random.normal(k_x2a, (64, C), dtype=jnp.float32)
    out2d = jax.block_until_ready(fwd(x2d, bias_param))
    ref2d = x2d + bias_param.reshape(1, C)
    assert jnp.allclose(out2d, ref2d, atol=1e-6), "2D (dense path) mismatch"

    # 2D case, small fallback path: (8, C).
    x2s = jax.random.normal(k_x2b, (8, C), dtype=jnp.float32)
    out2s = jax.block_until_ready(fwd(x2s, bias_param))
    ref2s = x2s + bias_param.reshape(1, C)
    assert jnp.allclose(out2s, ref2s, atol=1e-6), "2D (fallback path) mismatch"

    # 4D NCHW case: (N, C, H, W), no transposes — H*W on the lane axis.
    x4d = jax.random.normal(k_x4, (2, C, 16, 16), dtype=jnp.float32)
    out4d = jax.block_until_ready(fwd(x4d, bias_param))
    ref4d = x4d + bias_param.reshape(1, C, 1, 1)
    assert jnp.allclose(out4d, ref4d, atol=1e-6), "4D mismatch"

    print("KERNEL_OK")
</pallas_src>

<mosaic_0001>
module attributes {stable_mosaic.version = 11 : i64} {
  func.func @_bias_add_kernel(%arg0: i32, %arg1: i32, %arg2: memref<2x128xf32, #tpu.memory_space<vmem>>, %arg3: memref<1x128xf32, #tpu.memory_space<vmem>>, %arg4: memref<2x128xf32, #tpu.memory_space<vmem>>) attributes {dimension_semantics = [#tpu.dimension_semantics<parallel>, #tpu.dimension_semantics<parallel>], iteration_bounds = array<i64: 1, 1>, scalar_prefetch = 0 : i64, scratch_operands = 0 : i64, tpu.core_type = #tpu.core_type<tc>, window_params = [{transform_indices = @transform_0, window_bounds = array<i64: 2, 128>}, {transform_indices = @transform_1, window_bounds = array<i64: 1, 128>}, {transform_indices = @transform_2, window_bounds = array<i64: 2, 128>}]} {
    %c0 = arith.constant 0 : index
    %c0_0 = arith.constant 0 : index
    %0 = vector.load %arg2[%c0, %c0_0] : memref<2x128xf32, #tpu.memory_space<vmem>>, vector<2x128xf32>
    %c0_1 = arith.constant 0 : index
    %c0_2 = arith.constant 0 : index
    %1 = vector.load %arg3[%c0_1, %c0_2] : memref<1x128xf32, #tpu.memory_space<vmem>>, vector<1x128xf32>
    %2 = vector.broadcast %1 : vector<1x128xf32> to vector<2x128xf32>
    %3 = arith.addf %0, %2 : vector<2x128xf32>
    %c0_3 = arith.constant 0 : index
    %c0_4 = arith.constant 0 : index
    %4 = vector.load %arg4[%c0_3, %c0_4] : memref<2x128xf32, #tpu.memory_space<vmem>>, vector<2x128xf32>
    tpu.vector_store %arg4[%c0_3, %c0_4], %3 {strides = array<i32>} : memref<2x128xf32, #tpu.memory_space<vmem>>, vector<2x128xf32>,
    return
  }
  func.func @transform_0(%arg0: i32, %arg1: i32) -> (i32, i32) {
    %c0_i32 = arith.constant 0 : i32
    return %arg0, %arg1 : i32, i32
  }
  func.func @transform_1(%arg0: i32, %arg1: i32) -> (i32, i32) {
    %c0_i32 = arith.constant 0 : i32
    %c0_i32_0 = arith.constant 0 : i32
    return %c0_i32, %arg1 : i32, i32
  }
  func.func @transform_2(%arg0: i32, %arg1: i32) -> (i32, i32) {
    %c0_i32 = arith.constant 0 : i32
    return %arg0, %arg1 : i32, i32
  }
}

</mosaic_0001>

<llo_original>
// kernel: tile.6
$region0: #{tile.6}
  #allocation0 [shape = 's32[1]{0}', space=sflag, size = 0x4, scoped, tag = 'scoped memory for tile.6']
  %s0 = inlined_call_operand.vmem [shape: f32[4], index: 0, kind: input, shape index: {}]
  %s1 = inlined_call_operand.vmem [shape: f32[32,4], index: 1, kind: output, shape index: {}]
  // Predicated region
  $region2: #{tile.6} parent=0 // pred_check
    _
  $region3: #{tile.6} parent=0 // pred_check_branch
    %3 = sbr.rel (0) target = $region5
  $region4: #{tile.6} parent=0 // pred_region
    _
  $region5: #{tile.6} parent=0 // pred_fallthru
    _
  %v4 = vld [vmem:[%s0] ss:$0 sm:$0xff]
  %5 = vst [vmem:[%s1] sm:$0xff] %v4
  %s6 = scalar_lea.vmem %s1, 8
  %7 = vst [vmem:[%s6] sm:$0xff] %v4
  %s8 = scalar_lea.vmem %s1, 16
  %9 = vst [vmem:[%s8] sm:$0xff] %v4
  %s10 = scalar_lea.vmem %s1, 24
  %11 = vst [vmem:[%s10] sm:$0xff] %v4

// kernel: tile.7
$region0: #{tile.7}
  %s0 = inlined_call_operand.vmem [shape: f32[32,4], index: 0, kind: input, shape index: {}]
  %s1 = inlined_call_operand.vmem [shape: f32[1,128], index: 1, kind: output, shape index: {}]
  $region1: #{tile.7} parent=0
    #allocation0 [shape = 'u8[4096]{0}', space=vmem, size = 0x1000, scoped, tag = 'scoped mem for output reshape']
    %v2 = vld [vmem:[%s0] sm:$0x1]
    %vm3 = vcmask 31744
    %4 = vst.msk [vmem:[#allocation0] sm:$0x1] %vm3, %v2
    %s5 = scalar_lea.vmem %s0, 31
    %v6 = vld [vmem:[%s5] sm:$0x1]
    %7 = vrot.lane.b32.xlu0 %v6, 124
    %v8 = vpop.permute.xlu0 %7
    %vm9 = vcmask 1048544
    %10 = vst.msk [vmem:[#allocation0] sm:$0x1] %vm9, %v8
    %s11 = scalar_lea.vmem %s0, 30
    %v12 = vld [vmem:[%s11] sm:$0x1]
    %13 = vrot.lane.b32.xlu0 %v12, 120
    %v14 = vpop.permute.xlu0 %13
    %vm15 = vcmask 1015744
    %16 = vst.msk [vmem:[#allocation0] sm:$0x1] %vm15, %v14
    %s17 = scalar_lea.vmem %s0, 29
    %v18 = vld [vmem:[%s17] sm:$0x1]
    %19 = vrot.lane.b32.xlu0 %v18, 116
    %v20 = vpop.permute.xlu0 %19
    %vm21 = vcmask 982944
    %22 = vst.msk [vmem:[#allocation0] sm:$0x1] %vm21, %v20
    %s23 = scalar_lea.vmem %s0, 28
    %v24 = vld [vmem:[%s23] sm:$0x1]
    %25 = vrot.lane.b32.xlu0 %v24, 112
    %v26 = vpop.permute.xlu0 %25
    %vm27 = vcmask 950144
    %28 = vst.msk [vmem:[#allocation0] sm:$0x1] %vm27, %v26
    %s29 = scalar_lea.vmem %s0, 27
    %v30 = vld [vmem:[%s29] sm:$0x1]
    %31 = vrot.lane.b32.xlu0 %v30, 108
    %v32 = vpop.permute.xlu0 %31
    %vm33 = vcmask 917344
    %34 = vst.msk [vmem:[#allocation0] sm:$0x1] %vm33, %v32
    %s35 = scalar_lea.vmem %s0, 26
    %v36 = vld [vmem:[%s35] sm:$0x1]
    %37 = vrot.lane.b32.xlu0 %v36, 104
    %v38 = vpop.permute.xlu0 %37
    %vm39 = vcmask 884544
    %40 = vst.msk [vmem:[#allocation0] sm:$0x1] %vm39, %v38
    %s41 = scalar_lea.vmem %s0, 25
    %v42 = vld [vmem:[%s41] sm:$0x1]
    %43 = vrot.lane.b32.xlu0 %v42, 100
    %v44 = vpop.permute.xlu0 %43
    %vm45 = vcmask 851744
    %46 = vst.msk [vmem:[#allocation0] sm:$0x1] %vm45, %v44
    %s47 = scalar_lea.vmem %s0, 24
    %v48 = vld [vmem:[%s47] sm:$0x1]
    %49 = vrot.lane.b32.xlu0 %v48, 96
    %v50 = vpop.permute.xlu0 %49
    %vm51 = vcmask 818944
    %52 = vst.msk [vmem:[#allocation0] sm:$0x1] %vm51, %v50
    %s53 = scalar_lea.vmem %s0, 23
    %v54 = vld [vmem:[%s53] sm:$0x1]
    %55 = vrot.lane.b32.xlu0 %v54, 92
    %v56 = vpop.permute.xlu0 %55
    %vm57 = vcmask 786144
    %58 = vst.msk [vmem:[#allocation0] sm:$0x1] %vm57, %v56
    %s59 = scalar_lea.vmem %s0, 22
    %v60 = vld [vmem:[%s59] sm:$0x1]
    %61 = vrot.lane.b32.xlu0 %v60, 88
    %v62 = vpop.permute.xlu0 %61
    %vm63 = vcmask 753344
    %64 = vst.msk [vmem:[#allocation0] sm:$0x1] %vm63, %v62
    %s65 = scalar_lea.vmem %s0, 21
    %v66 = vld [vmem:[%s65] sm:$0x1]
    %67 = vrot.lane.b32.xlu0 %v66, 84
    %v68 = vpop.permute.xlu0 %67
    %vm69 = vcmask 720544
    %70 = vst.msk [vmem:[#allocation0] sm:$0x1] %vm69, %v68
    %s71 = scalar_lea.vmem %s0, 20
    %v72 = vld [vmem:[%s71] sm:$0x1]
    %73 = vrot.lane.b32.xlu0 %v72, 80
    %v74 = vpop.permute.xlu0 %73
    %vm75 = vcmask 687744
    %76 = vst.msk [vmem:[#allocation0] sm:$0x1] %vm75, %v74
    %s77 = scalar_lea.vmem %s0, 19
    %v78 = vld [vmem:[%s77] sm:$0x1]
    %79 = vrot.lane.b32.xlu0 %v78, 76
    %v80 = vpop.permute.xlu0 %79
    %vm81 = vcmask 654944
    %82 = vst.msk [vmem:[#allocation0] sm:$0x1] %vm81, %v80
    %s83 = scalar_lea.vmem %s0, 18
    %v84 = vld [vmem:[%s83] sm:$0x1]
    %85 = vrot.lane.b32.xlu0 %v84, 72
    %v86 = vpop.permute.xlu0 %85
    %vm87 = vcmask 622144
    %88 = vst.msk [vmem:[#allocation0] sm:$0x1] %vm87, %v86
    %s89 = scalar_lea.vmem %s0, 17
    %v90 = vld [vmem:[%s89] sm:$0x1]
    %91 = vrot.lane.b32.xlu0 %v90, 68
    %v92 = vpop.permute.xlu0 %91
    %vm93 = vcmask 589344
    %94 = vst.msk [vmem:[#allocation0] sm:$0x1] %vm93, %v92
    %s95 = scalar_lea.vmem %s0, 16
    %v96 = vld [vmem:[%s95] sm:$0x1]
    %97 = vrot.lane.b32.xlu0 %v96, 64
    %v98 = vpop.permute.xlu0 %97
    %vm99 = vcmask 556544
    %100 = vst.msk [vmem:[#allocation0] sm:$0x1] %vm99, %v98
    %s101 = scalar_lea.vmem %s0, 15
    %v102 = vld [vmem:[%s101] sm:$0x1]
    %103 = vrot.lane.b32.xlu0 %v102, 60
    %v104 = vpop.permute.xlu0 %103
    %vm105 = vcmask 523744
    %106 = vst.msk [vmem:[#allocation0] sm:$0x1] %vm105, %v104
    %s107 = scalar_lea.vmem %s0, 14
    %v108 = vld [vmem:[%s107] sm:$0x1]
    %109 = vrot.lane.b32.xlu0 %v108, 56
    %v110 = vpop.permute.xlu0 %109
    %vm111 = vcmask 490944
    %112 = vst.msk [vmem:[#allocation0] sm:$0x1] %vm111, %v110
    %s113 = scalar_lea.vmem %s0, 13
    %v114 = vld [vmem:[%s113] sm:$0x1]
    %115 = vrot.lane.b32.xlu0 %v114, 52
    %v116 = vpop.permute.xlu0 %115
    %vm117 = vcmask 458144
    %118 = vst.msk [vmem:[#allocation0] sm:$0x1] %vm117, %v116
    %s119 = scalar_lea.vmem %s0, 12
    %v120 = vld [vmem:[%s119] sm:$0x1]
    %121 = vrot.lane.b32.xlu0 %v120, 48
    %v122 = vpop.permute.xlu0 %121
    %vm123 = vcmask 425344
    %124 = vst.msk [vmem:[#allocation0] sm:$0x1] %vm123, %v122
    %s125 = scalar_lea.vmem %s0, 11
    %v126 = vld [vmem:[%s125] sm:$0x1]
    %127 = vrot.lane.b32.xlu0 %v126, 44
    %v128 = vpop.permute.xlu0 %127
    %vm129 = vcmask 392544
    %130 = vst.msk [vmem:[#allocation0] sm:$0x1] %vm129, %v128
    %s131 = scalar_lea.vmem %s0, 10
    %v132 = vld [vmem:[%s131] sm:$0x1]
    %133 = vrot.lane.b32.xlu0 %v132, 40
    %v134 = vpop.permute.xlu0 %133
    %vm135 = vcmask 359744
    %136 = vst.msk [vmem:[#allocation0] sm:$0x1] %vm135, %v134
    %s137 = scalar_lea.vmem %s0, 9
    %v138 = vld [vmem:[%s137] sm:$0x1]
    %139 = vrot.lane.b32.xlu0 %v138, 36
    %v140 = vpop.permute.xlu0 %139
    %vm141 = vcmask 326944
    %142 = vst.msk [vmem:[#allocation0] sm:$0x1] %vm141, %v140
    %s143 = scalar_lea.vmem %s0, 8
    %v144 = vld [vmem:[%s143] sm:$0x1]
    %145 = vrot.lane.b32.xlu0 %v144, 32
    %v146 = vpop.permute.xlu0 %145
    %vm147 = vcmask 294144
    %148 = vst.msk [vmem:[#allocation0] sm:$0x1] %vm147, %v146
    %s149 = scalar_lea.vmem %s0, 7
    %v150 = vld [vmem:[%s149] sm:$0x1]
    %151 = vrot.lane.b32.xlu0 %v150, 28
    %v152 = vpop.permute.xlu0 %151
    %vm153 = vcmask 261344
    %154 = vst.msk [vmem:[#allocation0] sm:$0x1] %vm153, %v152
    %s155 = scalar_lea.vmem %s0, 6
    %v156 = vld [vmem:[%s155] sm:$0x1]
    %157 = vrot.lane.b32.xlu0 %v156, 24
    %v158 = vpop.permute.xlu0 %157
    %vm159 = vcmask 228544
    %160 = vst.msk [vmem:[#allocation0] sm:$0x1] %vm159, %v158
    %s161 = scalar_lea.vmem %s0, 5
    %v162 = vld [vmem:[%s161] sm:$0x1]
    %163 = vrot.lane.b32.xlu0 %v162, 20
    %v164 = vpop.permute.xlu0 %163
    %vm165 = vcmask 195744
    %166 = vst.msk [vmem:[#allocation0] sm:$0x1] %vm165, %v164
    %s167 = scalar_lea.vmem %s0, 4
    %v168 = vld [vmem:[%s167] sm:$0x1]
    %169 = vrot.lane.b32.xlu0 %v168, 16
    %v170 = vpop.permute.xlu0 %169
    %vm171 = vcmask 162944
    %172 = vst.msk [vmem:[#allocation0] sm:$0x1] %vm171, %v170
    %s173 = scalar_lea.vmem %s0, 3
    %v174 = vld [vmem:[%s173] sm:$0x1]
    %175 = vrot.lane.b32.xlu0 %v174, 12
    %v176 = vpop.permute.xlu0 %175
    %vm177 = vcmask 130144
    %178 = vst.msk [vmem:[#allocation0] sm:$0x1] %vm177, %v176
    %s179 = scalar_lea.vmem %s0, 2
    %v180 = vld [vmem:[%s179] sm:$0x1]
    %181 = vrot.lane.b32.xlu0 %v180, 8
    %v182 = vpop.permute.xlu0 %181
    %vm183 = vcmask 97344
    %184 = vst.msk [vmem:[#allocation0] sm:$0x1] %vm183, %v182
    %s185 = scalar_lea.vmem %s0, 1
    %v186 = vld [vmem:[%s185] sm:$0x1]
    %187 = vrot.lane.b32.xlu0 %v186, 4
    %v188 = vpop.permute.xlu0 %187
    %vm189 = vcmask 64544
    %190 = vst.msk [vmem:[#allocation0] sm:$0x1] %vm189, %v188
    %s192 = ssub.s32 2, 1
    %v193 = vld [vmem:[#allocation0] sm:%s192]
    %s195 = ssub.s32 2, 1
    %196 = vst [vmem:[%s1] sm:%s195] %v193

</llo_original>
